<compile_context>
chip_gen: v6e
topology: v6e:2x2x1
jax: 0.10.0
libtpu: 0.0.40
codegen_flags: <defaults>
</compile_context>

<pallas_src>
import functools

import numpy as np
import jax
import jax.numpy as jnp
from jax.experimental import pallas as pl
from jax.experimental.pallas import tpu as pltpu


def make_positional_encoding(max_length: int, hid_dim: int,
                             dtype=jnp.float32) -> jnp.ndarray:
    """Builds the sinusoidal PE buffer once, shape [max_length, 1, hid_dim] in `dtype`."""
    position = jnp.arange(0, max_length, dtype=jnp.float32)[:, None]          # [L, 1]
    div_term = jnp.exp(
        jnp.arange(0, hid_dim, 2, dtype=jnp.float32) * (-np.log(10000.0) / hid_dim)
    )                                                                          # [H/2]
    pe = jnp.zeros((max_length, hid_dim), dtype=jnp.float32)
    pe = pe.at[:, 0::2].set(jnp.sin(position * div_term))
    pe = pe.at[:, 1::2].set(jnp.cos(position * div_term))
    # Matches PyTorch's pe.unsqueeze(0).transpose(0,1) -> [max_length, 1, hid_dim].
    # Cast once at init (perf feedback: no per-call astype HBM round-trip).
    return pe[:, None, :].astype(dtype)


def _fmix32(x):
    """murmur3-style 32-bit avalanche finalizer on uint32 arrays (VPU-only ops)."""
    x = x ^ (x >> 16)
    x = x * jnp.uint32(0x7FEB352D)
    x = x ^ (x >> 15)
    x = x * jnp.uint32(0x846CA68B)
    x = x ^ (x >> 16)
    return x


def _pe_kernel(seed_ref, x_ref, pe_ref, o_ref, *, dropout_p: float, training: bool,
               tile_s: int, tile_h: int, batch: int, hid_dim: int):
    # seed_ref: (1,) int32 SMEM scalar-prefetch
    # x_ref   : (tile_s, B, tile_h) VMEM
    # pe_ref  : (tile_s, 1, tile_h) VMEM, already in x.dtype
    x = x_ref[...]
    pe = pe_ref[...]
    y = x + pe                                  # sublane broadcast over batch axis

    if training and dropout_p > 0.0:
        # Inverted dropout: keep with prob (1-p); scale kept values by 1/(1-p).
        # Stateless counter-based PRNG: hash(global_linear_index ^ mix(seed)).
        # Works on TPU and in interpret mode (plain integer VPU ops, no prng_seed).
        shape = y.shape
        s0 = (pl.program_id(0) * tile_s).astype(jnp.uint32)
        h0 = (pl.program_id(1) * tile_h).astype(jnp.uint32)
        s_idx = jax.lax.broadcasted_iota(jnp.int32, shape, 0).astype(jnp.uint32) + s0
        b_idx = jax.lax.broadcasted_iota(jnp.int32, shape, 1).astype(jnp.uint32)
        h_idx = jax.lax.broadcasted_iota(jnp.int32, shape, 2).astype(jnp.uint32) + h0
        lin = (s_idx * jnp.uint32(batch) + b_idx) * jnp.uint32(hid_dim) + h_idx

        seed_u = seed_ref[0].astype(jnp.uint32) * jnp.uint32(0x9E3779B1)
        bits = _fmix32(lin ^ seed_u)

        # Integer-domain threshold compare (no int->float convert).
        threshold = np.uint32(min(int(round(dropout_p * 2.0 ** 32)), 2 ** 32 - 1))
        keep = bits >= jnp.uint32(threshold)
        scale = jnp.asarray(1.0 / (1.0 - dropout_p), dtype=y.dtype)
        y = jnp.where(keep, y * scale, jnp.zeros_like(y))
        # TODO(synk): on v7x (VALU-bound in training) draw one u32 per two bf16 elems.

    o_ref[...] = y.astype(o_ref.dtype)


def positional_encoding_forward(x, pe_table, *, dropout_p: float = 0.1,
                                training: bool = False, seed: int = 0,
                                target_block_bytes: int = 4 * 1024 * 1024,
                                donate_x: bool = False):
    """x: [seq_len, batch, hid_dim]; pe_table: [max_length, 1, hid_dim] (same dtype).

    Returns the same shape/dtype as x.
    """
    S, B, H = x.shape
    assert S <= pe_table.shape[0], "seq_len exceeds max_length"
    assert pe_table.ndim == 3 and pe_table.shape[1] == 1 and pe_table.shape[2] == H
    if pe_table.dtype != x.dtype:
        # Fallback only; callers should pre-cast at init (see make_positional_encoding).
        pe_table = pe_table.astype(x.dtype)

    itemsize = jnp.dtype(x.dtype).itemsize
    row_bytes = B * H * itemsize

    # Block selection: ~4 MiB blocks over S; if a single (B, H) row is already larger,
    # tile H as well (multiples of 128) so VMEM residency stays bounded on v7x.
    if row_bytes <= target_block_bytes:
        tile_h = H
        tile_s = int(max(1, min(S, target_block_bytes // max(row_bytes, 1))))
    else:
        tile_s = 1
        lanes = 128
        max_h = max(lanes, (target_block_bytes // max(B * itemsize, 1)) // lanes * lanes)
        tile_h = int(min(H, max_h))
        if tile_h != H:
            tile_h = max(lanes, (tile_h // lanes) * lanes)

    grid = (pl.cdiv(S, tile_s), pl.cdiv(H, tile_h))

    seed_arr = jnp.array([seed], dtype=jnp.int32)

    kernel = functools.partial(_pe_kernel, dropout_p=float(dropout_p),
                               training=bool(training), tile_s=tile_s, tile_h=tile_h,
                               batch=B, hid_dim=H)

    cost = pl.CostEstimate(
        flops=S * B * H,
        transcendentals=0,
        bytes_accessed=2 * S * B * H * itemsize + S * H * itemsize,
    )

    grid_spec = pltpu.PrefetchScalarGridSpec(
        num_scalar_prefetch=1,                  # seed lands in SMEM
        grid=grid,
        in_specs=[
            pl.BlockSpec((tile_s, B, tile_h), lambda i, j, seed_ref: (i, 0, j)),   # x
            pl.BlockSpec((tile_s, 1, tile_h), lambda i, j, seed_ref: (i, 0, j)),   # pe
        ],
        out_specs=pl.BlockSpec((tile_s, B, tile_h), lambda i, j, seed_ref: (i, 0, j)),
    )

    return pl.pallas_call(
        kernel,
        out_shape=jax.ShapeDtypeStruct((S, B, H), x.dtype),
        grid_spec=grid_spec,
        compiler_params=pltpu.CompilerParams(
            # Both axes parallel: lets the grid shard across v7x's 2 TensorCores
            # (harmless no-op on v5e/v6e single-TC chips).
            dimension_semantics=("parallel", "parallel"),
            # 4 buffers x ~4 MiB + pe << 28 MiB; must be raised above v5e's 16 MiB
            # scoped default, and leaves headroom in v7x's 64 MiB physical VMEM.
            vmem_limit_bytes=28 * 1024 * 1024,
        ),
        cost_estimate=cost,
        input_output_aliases=({1: 0} if donate_x else {}),
    )(seed_arr, x, pe_table)


if __name__ == "__main__":
    # Small, module-consistent shapes: seq=8, batch=2, hid_dim=32.
    seq_len, batch, hid_dim = 8, 2, 32
    max_length = 100
    dropout_p = 0.1

    key = jax.random.PRNGKey(0)
    x = jax.random.normal(key, (seq_len, batch, hid_dim), dtype=jnp.float32)

    pe_table = make_positional_encoding(max_length, hid_dim, dtype=x.dtype)

    # Eval-mode forward (dropout is identity in eval, matching nn.Dropout.eval()).
    out = positional_encoding_forward(x, pe_table, dropout_p=dropout_p,
                                      training=False)
    out = jax.block_until_ready(out)

    ref = x + pe_table[:seq_len]                 # [S,1,H] broadcast over batch
    np.testing.assert_allclose(np.asarray(out), np.asarray(ref),
                               rtol=1e-6, atol=1e-6)

    # Training-mode forward: every element must be either 0 (dropped) or ref/(1-p).
    out_tr = positional_encoding_forward(x, pe_table, dropout_p=dropout_p,
                                         training=True, seed=1234)
    out_tr = np.asarray(jax.block_until_ready(out_tr))
    ref_np = np.asarray(ref)
    scaled = ref_np / (1.0 - dropout_p)
    is_dropped = np.abs(out_tr) <= 1e-6
    is_kept = np.abs(out_tr - scaled) <= 1e-5 + 1e-5 * np.abs(scaled)
    assert bool(np.all(np.logical_or(is_dropped, is_kept))), \
        "training-mode dropout produced unexpected values"
    drop_frac = float(np.mean(is_dropped & ~is_kept))
    assert drop_frac < 0.5, "dropout dropped an implausible fraction of elements"

    print("KERNEL_OK")
</pallas_src>

<mosaic_0001>
module attributes {stable_mosaic.version = 11 : i64} {
  func.func @_pe_kernel(%arg0: i32, %arg1: i32, %arg2: memref<1xi32, #tpu.memory_space<smem>>, %arg3: memref<8x2x32xf32, #tpu.memory_space<vmem>>, %arg4: memref<8x1x32xf32, #tpu.memory_space<vmem>>, %arg5: memref<8x2x32xf32, #tpu.memory_space<vmem>>) attributes {dimension_semantics = [#tpu.dimension_semantics<parallel>, #tpu.dimension_semantics<parallel>], iteration_bounds = array<i64: 1, 1>, scalar_prefetch = 1 : i64, scratch_operands = 0 : i64, tpu.core_type = #tpu.core_type<tc>, window_params = [{transform_indices = @transform_0, window_bounds = array<i64: 8, 2, 32>}, {transform_indices = @transform_1, window_bounds = array<i64: 8, 1, 32>}, {transform_indices = @transform_2, window_bounds = array<i64: 8, 2, 32>}]} {
    %c0 = arith.constant 0 : index
    %c0_0 = arith.constant 0 : index
    %c0_1 = arith.constant 0 : index
    %0 = vector.load %arg3[%c0, %c0_0, %c0_1] : memref<8x2x32xf32, #tpu.memory_space<vmem>>, vector<8x2x32xf32>
    %c0_2 = arith.constant 0 : index
    %c0_3 = arith.constant 0 : index
    %c0_4 = arith.constant 0 : index
    %1 = vector.load %arg4[%c0_2, %c0_3, %c0_4] : memref<8x1x32xf32, #tpu.memory_space<vmem>>, vector<8x1x32xf32>
    %2 = vector.broadcast %1 : vector<8x1x32xf32> to vector<8x2x32xf32>
    %3 = arith.addf %0, %2 : vector<8x2x32xf32>
    %c0_5 = arith.constant 0 : index
    %c0_6 = arith.constant 0 : index
    %c0_7 = arith.constant 0 : index
    %4 = vector.load %arg5[%c0_5, %c0_6, %c0_7] : memref<8x2x32xf32, #tpu.memory_space<vmem>>, vector<8x2x32xf32>
    tpu.vector_store %arg5[%c0_5, %c0_6, %c0_7], %3 {strides = array<i32>} : memref<8x2x32xf32, #tpu.memory_space<vmem>>, vector<8x2x32xf32>,
    return
  }
  func.func @transform_0(%arg0: i32, %arg1: i32, %arg2: memref<1xi32, #tpu.memory_space<smem>>) -> (i32, i32, i32) {
    %c0_i32 = arith.constant 0 : i32
    %c0_i32_0 = arith.constant 0 : i32
    return %arg0, %c0_i32, %arg1 : i32, i32, i32
  }
  func.func @transform_1(%arg0: i32, %arg1: i32, %arg2: memref<1xi32, #tpu.memory_space<smem>>) -> (i32, i32, i32) {
    %c0_i32 = arith.constant 0 : i32
    %c0_i32_0 = arith.constant 0 : i32
    return %arg0, %c0_i32, %arg1 : i32, i32, i32
  }
  func.func @transform_2(%arg0: i32, %arg1: i32, %arg2: memref<1xi32, #tpu.memory_space<smem>>) -> (i32, i32, i32) {
    %c0_i32 = arith.constant 0 : i32
    %c0_i32_0 = arith.constant 0 : i32
    return %arg0, %c0_i32, %arg1 : i32, i32, i32
  }
}

</mosaic_0001>

<llo_original>
// kernel: tpu_custom_call.1
$region0: #{tpu_custom_call.1}
  #allocation0 [shape = 'u32[]', space=smem, size = 0x4, offset = 0x4, fixed_abs, tag = 'smem constant byte address 0x4 - core index']
  #allocation1 [shape = 'u32[144,128]{1,0:T(1,128)}', space=vmem, size = 0x12000, scoped, tag = 'internal scratch']
  #allocation2 [shape = 's32[1]{0}', space=sflag, size = 0x4, scoped, tag = 'scoped memory for tpu_custom_call.1']
  #allocation3 [shape = 's32[1]{0:T(128)S(6)}', space=smem, size = 0x200, scoped, tag = 'prefetched SMEM operand 0']
  %s0 = inlined_call_operand.<no memory space> [shape: s32[1], index: 0, kind: input, shape index: {}]
  %s1 = inlined_call_operand.vmem [shape: f32[8,2,32], index: 1, kind: input, shape index: {}]
  %s2 = inlined_call_operand.vmem [shape: f32[100,1,32], index: 2, kind: input, shape index: {}]
  %s3 = inlined_call_operand.hbm [shape: f32[8,2,32], index: 3, kind: output, shape index: {}]
  %s4 = sld [smem:[#allocation0]]
  $region18: #{tpu_custom_call.1} parent=0
    _
  %s6 = ssub.s32 1, %s4
  %s7 = scalar_select 0, %s6, %s4
  %8 = sst [smem:[#allocation3]] %s0
  $region1: #{tpu_custom_call.1} parent=0
    #allocation4 [shape = 'u8[8192]{0}', space=vmem, size = 0x2000, scoped, tag = 'output window, operand 0, single buffered']
    #allocation5 [shape = 's32[1]{0}', space=sflag, size = 0x4, scoped, tag = 'scoped memory for tpu_custom_call.1']
    %9 = vsyncpa [#allocation5], 0
    // Predicated region
    $region2: #{tpu_custom_call.1} parent=1 // pred_check
      _
    $region3: #{tpu_custom_call.1} parent=1 // pred_check_branch
      %11 = sbr.rel (0) target = $region5
    $region4: #{tpu_custom_call.1} parent=1 // pred_region
      _
    $region5: #{tpu_custom_call.1} parent=1 // pred_fallthru
      _
    // Predicated region
    $region6: #{tpu_custom_call.1} parent=1 // pred_check
      _
    $region7: #{tpu_custom_call.1} parent=1 // pred_check_branch
      %13 = sbr.rel (0) target = $region9
    $region8: #{tpu_custom_call.1} parent=1 // pred_region
      _
    $region9: #{tpu_custom_call.1} parent=1 // pred_fallthru
      _
    %v14 = vld [vmem:[%s1] sm:$0x3]
    %v15 = vld [vmem:[%s1 + $0x2] sm:$0x3]
    %v16 = vld [vmem:[%s1 + $0x4] sm:$0x3]
    %v17 = vld [vmem:[%s1 + $0x6] sm:$0x3]
    %v18 = vld [vmem:[%s1 + $0x8] sm:$0x3]
    %v19 = vld [vmem:[%s1 + $0xa] sm:$0x3]
    %v20 = vld [vmem:[%s1 + $0xc] sm:$0x3]
    %v21 = vld [vmem:[%s1 + $0xe] sm:$0x3]
    %v22 = vld [vmem:[%s2] sm:$0x1]
    %v23 = vld [vmem:[%s2 + $0x1] sm:$0x1]
    %v24 = vld [vmem:[%s2 + $0x2] sm:$0x1]
    %v25 = vld [vmem:[%s2 + $0x3] sm:$0x1]
    %v26 = vld [vmem:[%s2 + $0x4] sm:$0x1]
    %v27 = vld [vmem:[%s2 + $0x5] sm:$0x1]
    %v28 = vld [vmem:[%s2 + $0x6] sm:$0x1]
    %v29 = vld [vmem:[%s2 + $0x7] sm:$0x1]
    %v38 = vlaneseq
    %v39 = vshrl.u32 %v38, 7
    %v40 = vsub.s32 0, %v39
    %v41 = vrot.slane %v22, %v40
    %v42 = vlaneseq
    %v43 = vshrl.u32 %v42, 7
    %v44 = vsub.s32 0, %v43
    %v45 = vrot.slane %v23, %v44
    %v46 = vlaneseq
    %v47 = vshrl.u32 %v46, 7
    %v48 = vsub.s32 0, %v47
    %v49 = vrot.slane %v24, %v48
    %v50 = vlaneseq
    %v51 = vshrl.u32 %v50, 7
    %v52 = vsub.s32 0, %v51
    %v53 = vrot.slane %v25, %v52
    %v54 = vlaneseq
    %v55 = vshrl.u32 %v54, 7
    %v56 = vsub.s32 0, %v55
    %v57 = vrot.slane %v26, %v56
    %v58 = vlaneseq
    %v59 = vshrl.u32 %v58, 7
    %v60 = vsub.s32 0, %v59
    %v61 = vrot.slane %v27, %v60
    %v62 = vlaneseq
    %v63 = vshrl.u32 %v62, 7
    %v64 = vsub.s32 0, %v63
    %v65 = vrot.slane %v28, %v64
    %v66 = vlaneseq
    %v67 = vshrl.u32 %v66, 7
    %v68 = vsub.s32 0, %v67
    %v69 = vrot.slane %v29, %v68
    %v78 = vadd.f32 %v14, %v41
    %v79 = vadd.f32 %v15, %v45
    %v80 = vadd.f32 %v16, %v49
    %v81 = vadd.f32 %v17, %v53
    %v82 = vadd.f32 %v18, %v57
    %v83 = vadd.f32 %v19, %v61
    %v84 = vadd.f32 %v20, %v65
    %v85 = vadd.f32 %v21, %v69
    %vm86 = vcmask 254976
    %87 = vst.msk [vmem:[#allocation4] sm:$0x3] %vm86, %v78
    %88 = vst.msk [vmem:[#allocation4 + $0x2] sm:$0x3] %vm86, %v79
    %89 = vst.msk [vmem:[#allocation4 + $0x4] sm:$0x3] %vm86, %v80
    %90 = vst.msk [vmem:[#allocation4 + $0x6] sm:$0x3] %vm86, %v81
    %91 = vst.msk [vmem:[#allocation4 + $0x8] sm:$0x3] %vm86, %v82
    %92 = vst.msk [vmem:[#allocation4 + $0xa] sm:$0x3] %vm86, %v83
    %93 = vst.msk [vmem:[#allocation4 + $0xc] sm:$0x3] %vm86, %v84
    %94 = vst.msk [vmem:[#allocation4 + $0xe] sm:$0x3] %vm86, %v85
    // Predicated region
    $region10: #{tpu_custom_call.1} parent=1 // pred_check
      _
    $region11: #{tpu_custom_call.1} parent=1 // pred_check_branch
      %96 = sbr.rel (0) target = $region13
    $region12: #{tpu_custom_call.1} parent=1 // pred_region
      %s98 = ssub.s32 256, 256
      %99 = vsyncadd [#allocation5], %s98
      %s100 = sshll.u32 [#allocation4], 4
      %s101 = int_to_ptr.vmem [resolvable:$true] %s100
      %106 = dma.vmem_to_hbm [thread:$0]  %s101, 256, %s3, [#allocation5], 32, 32, 2
    $region13: #{tpu_custom_call.1} parent=1 // pred_fallthru
      _
    // Predicated region
    $region14: #{tpu_custom_call.1} parent=1 // pred_check
      _
    $region15: #{tpu_custom_call.1} parent=1 // pred_check_branch
      %108 = sbr.rel (0) target = $region17
    $region16: #{tpu_custom_call.1} parent=1 // pred_region
      %109 = dma.done [#allocation5], 256
    $region17: #{tpu_custom_call.1} parent=1 // pred_fallthru
      _
    %110 = vsyncpa [#allocation5], 1

</llo_original>
